<compile_context>
chip_gen: v7x
topology: tpu7x:2x2x1
jax: 0.10.0
libtpu: 0.0.40
codegen_flags: <defaults>
</compile_context>

<pallas_src>
import functools

import jax
import jax.numpy as jnp
from jax.experimental import pallas as pl
from jax.experimental.pallas import tpu as pltpu


def _attention_gate_kernel(in_G, nb, x_ref, wcat_ref, bcat_ref, wpsi_ref,
                           bpsi_ref, out_ref):
    """One (batch-block, pixel-tile) block of the attention gate.

    x_ref:    (NB, C, TP)   input block, C = in_G + in_L
    wcat_ref: (inner, C)    folded [W_g | W_x] (conv+BN), cast to x dtype
    bcat_ref: (inner, 1)    folded b_g + b_x (f32)
    wpsi_ref: (1, inner)    folded psi conv+BN weight (f32)
    bpsi_ref: (1, 1)        folded psi conv+BN bias (f32)
    out_ref:  (NB, C, TP)   = concat([x, skip * sigmoid(psi)], channel axis)
    """
    w_cat = wcat_ref[...]                                   # (inner, C)
    b_cat = bcat_ref[...]                                   # (inner, 1) f32
    w_psi = wpsi_ref[...]                                   # (1, inner) f32
    b_psi = bpsi_ref[...]                                   # (1, 1) f32

    C = x_ref.shape[1]
    # Tiny (C, 1) channel mask; the select below broadcasts it across lanes.
    ch = jax.lax.broadcasted_iota(jnp.int32, (C, 1), 0)
    is_passthrough = ch < in_G                              # (C, 1) bool

    for b in range(nb):                                     # static unroll
        x = x_ref[b]                                        # (C, TP), x dtype

        # Fused 1x1 convs: relu(W_g @ x_g + W_x @ skip + b) == relu(W_cat @ x + b_cat)
        act = jnp.dot(w_cat, x,
                      preferred_element_type=jnp.float32) + b_cat
        act = jnp.maximum(act, 0.0)                         # (inner, TP) f32

        # psi = sigmoid(BN(conv1x1(act)))
        psi = jnp.dot(w_psi, act,
                      preferred_element_type=jnp.float32) + b_psi
        psi = jax.nn.sigmoid(psi)                           # (1, TP) f32

        # out = concat([x, skip * psi]) expressed as a per-channel scale so
        # the store is a single full (unmasked, lane-dense) write per image.
        scale = jnp.where(is_passthrough, jnp.float32(1.0), psi)   # (C, TP)
        out_ref[b] = (x * scale.astype(x.dtype)).astype(out_ref.dtype)


def _fold_bn(w, b, gamma, beta, mean, var, eps):
    """Fold inference-mode BatchNorm into a 1x1 conv (w: (C_out, C_in), b: (C_out,))."""
    scale = gamma / jnp.sqrt(var + eps)
    w_f = w * scale[:, None]
    b_f = (b - mean) * scale + beta
    return w_f, b_f


def _choose_tiling(N, C, HW, itemsize, *,
                   lane_cap=65536,
                   block_byte_cap=4 * 1024 * 1024,
                   target_steps=8):
    """Pick (batch_block, pixel_tile, n_pixel_tiles) under a VMEM budget."""
    # Largest lane count (multiple of 128) whose (C, TP) block fits the budget.
    lanes_budget = max(128, (block_byte_cap // max(1, C * itemsize)) // 128 * 128)
    cap = min(lane_cap, lanes_budget)

    if HW <= cap:
        pixel_tile = HW                       # full spatial extent: always legal
    else:
        # Largest multiple of 128 <= cap that divides HW (lane-dense, no ragged
        # edge); else a plain multiple of 128 with a ragged cdiv last tile.
        pixel_tile = 0
        t = (cap // 128) * 128
        while t >= 128:
            if HW % t == 0:
                pixel_tile = t
                break
            t -= 128
        if pixel_tile == 0:
            pixel_tile = (cap // 128) * 128   # ragged last tile handled by cdiv

    # Guarantee >= 2 grid steps when a single image would otherwise be one
    # block (keeps both of v7x's TensorCores busy).
    if N == 1 and pixel_tile == HW and HW >= 256:
        half = pl.cdiv(HW, 2)
        cand = pl.cdiv(half, 128) * 128
        if cand < HW:
            pixel_tile = cand

    steps_p = pl.cdiv(HW, pixel_tile)

    # Fold batch images into a block for small feature maps, but keep enough
    # total grid steps for pipelining / megacore sharding.
    nb = 1
    max_total = N * steps_p
    for cand in range(2, N + 1):
        if N % cand:
            continue
        if cand * C * pixel_tile * itemsize > block_byte_cap:
            break
        if (N // cand) * steps_p < min(target_steps, max_total):
            break
        nb = cand
    return nb, pixel_tile, steps_p


def attention_gate(x_nchw, params, in_G, in_L, *, bn_eps=1e-5):
    """x_nchw: (N, in_G + in_L, H, W).  Returns same shape / dtype."""
    N, C, H, W = x_nchw.shape
    assert C == in_G + in_L
    assert in_L % 2 == 0, "skip_channels must be even (inner = in_L // 2)"
    inner = in_L // 2
    HW = H * W
    itemsize = jnp.dtype(x_nchw.dtype).itemsize

    nb, pixel_tile, steps_p = _choose_tiling(N, C, HW, itemsize)

    # --- glue: fold BatchNorm (eval mode) into the 1x1 convs, fuse W_g/W_x ---
    wg, bg = _fold_bn(params["wg"], params["bg"], params["g_gamma"],
                      params["g_beta"], params["g_mean"], params["g_var"], bn_eps)
    wx, bx = _fold_bn(params["wx"], params["bx"], params["x_gamma"],
                      params["x_beta"], params["x_mean"], params["x_var"], bn_eps)
    wpsi, bpsi = _fold_bn(params["wpsi"], params["bpsi"], params["p_gamma"],
                          params["p_beta"], params["p_mean"], params["p_var"], bn_eps)
    # Fused first-stage weight, fed to the MXU in the input's storage dtype so a
    # bf16 input stays bf16 end-to-end (f32 accumulation via preferred_element_type).
    w_cat = jnp.concatenate([wg, wx], axis=1).astype(x_nchw.dtype)   # (inner, C)
    b_cat = (bg + bx).reshape(inner, 1).astype(jnp.float32)
    w_psi = wpsi.reshape(1, inner).astype(jnp.float32)
    b_psi = bpsi.reshape(1, 1).astype(jnp.float32)

    # --- kernel: grid over (batch-blocks, pixel tiles); reshape is free -------
    x_ncp = x_nchw.reshape(N, C, HW)
    grid = (N // nb, steps_p)
    kernel = functools.partial(_attention_gate_kernel, in_G, nb)

    out_ncp = pl.pallas_call(
        kernel,
        out_shape=jax.ShapeDtypeStruct((N, C, HW), x_nchw.dtype),
        grid_spec=pltpu.PrefetchScalarGridSpec(
            num_scalar_prefetch=0,
            grid=grid,
            in_specs=[
                pl.BlockSpec((nb, C, pixel_tile), lambda n, p: (n, 0, p)),
                pl.BlockSpec((inner, C), lambda n, p: (0, 0)),
                pl.BlockSpec((inner, 1), lambda n, p: (0, 0)),
                pl.BlockSpec((1, inner), lambda n, p: (0, 0)),
                pl.BlockSpec((1, 1), lambda n, p: (0, 0)),
            ],
            out_specs=pl.BlockSpec((nb, C, pixel_tile), lambda n, p: (n, 0, p)),
        ),
        compiler_params=pltpu.CompilerParams(
            dimension_semantics=("parallel", "parallel"),
            # 48 MiB: safe on v7x's 64 MiB VMEM, generous on v5e/v6e's 128 MiB,
            # and comfortably holds double-buffered 4 MiB blocks + f32 temps.
            vmem_limit_bytes=48 * 1024 * 1024,
        ),
    )(x_ncp, w_cat, b_cat, w_psi, b_psi)

    return out_ncp.reshape(N, C, H, W)


def attention_gate_reference(x_nchw, params, in_G, in_L, *, bn_eps=1e-5):
    """Pure-JAX reference (inference-mode BN), for correctness checking."""
    xg = x_nchw[:, :in_G]
    skip = x_nchw[:, in_G:]
    wg, bg = _fold_bn(params["wg"], params["bg"], params["g_gamma"],
                      params["g_beta"], params["g_mean"], params["g_var"], bn_eps)
    wx, bx = _fold_bn(params["wx"], params["bx"], params["x_gamma"],
                      params["x_beta"], params["x_mean"], params["x_var"], bn_eps)
    wpsi, bpsi = _fold_bn(params["wpsi"], params["bpsi"], params["p_gamma"],
                          params["p_beta"], params["p_mean"], params["p_var"], bn_eps)

    def conv1x1(inp, w, b):  # inp: (N, Cin, H, W), w: (Cout, Cin)
        return jnp.einsum("nchw,oc->nohw", inp, w) + b[None, :, None, None]

    g1 = conv1x1(xg, wg, bg)
    x1 = conv1x1(skip, wx, bx)
    act = jnp.maximum(g1 + x1, 0.0)
    psi = jax.nn.sigmoid(conv1x1(act, wpsi, bpsi))     # (N, 1, H, W)
    masked = skip * psi
    return jnp.concatenate([xg, masked], axis=1)


def init_params(key, in_G, in_L):
    inner = in_L // 2
    ks = jax.random.split(key, 6)
    p = {
        "wg": jax.random.normal(ks[0], (inner, in_G), jnp.float32) * 0.1,
        "bg": jax.random.normal(ks[1], (inner,), jnp.float32) * 0.1,
        "wx": jax.random.normal(ks[2], (inner, in_L), jnp.float32) * 0.1,
        "bx": jax.random.normal(ks[3], (inner,), jnp.float32) * 0.1,
        "wpsi": jax.random.normal(ks[4], (1, inner), jnp.float32) * 0.1,
        "bpsi": jax.random.normal(ks[5], (1,), jnp.float32) * 0.1,
        # BatchNorm (inference-mode) parameters / running stats
        "g_gamma": jnp.ones((inner,), jnp.float32) * 1.1,
        "g_beta": jnp.zeros((inner,), jnp.float32) + 0.05,
        "g_mean": jnp.zeros((inner,), jnp.float32) + 0.02,
        "g_var": jnp.ones((inner,), jnp.float32) * 0.9,
        "x_gamma": jnp.ones((inner,), jnp.float32) * 0.95,
        "x_beta": jnp.zeros((inner,), jnp.float32) - 0.03,
        "x_mean": jnp.zeros((inner,), jnp.float32) + 0.01,
        "x_var": jnp.ones((inner,), jnp.float32) * 1.05,
        "p_gamma": jnp.ones((1,), jnp.float32) * 1.2,
        "p_beta": jnp.zeros((1,), jnp.float32) + 0.1,
        "p_mean": jnp.zeros((1,), jnp.float32) + 0.05,
        "p_var": jnp.ones((1,), jnp.float32) * 0.8,
    }
    return p


if __name__ == "__main__":
    in_G, in_L = 4, 8            # in_channels, skip_channels
    key = jax.random.PRNGKey(0)
    k_x, k_p, k_x2 = jax.random.split(key, 3)
    params = init_params(k_p, in_G, in_L)

    # Primary case: N=2, 16x16 feature map.
    N, H, W = 2, 16, 16
    x = jax.random.normal(k_x, (N, in_G + in_L, H, W), jnp.float32)
    out = attention_gate(x, params, in_G, in_L)
    out = jax.block_until_ready(out)
    ref = attention_gate_reference(x, params, in_G, in_L)
    assert out.shape == (N, in_G + in_L, H, W)
    assert jnp.allclose(out, ref, atol=1e-5, rtol=1e-5)

    # Secondary case: N=1 larger map (exercises the pixel-tile split path).
    x2 = jax.random.normal(k_x2, (1, in_G + in_L, 48, 48), jnp.float32)
    out2 = jax.block_until_ready(attention_gate(x2, params, in_G, in_L))
    ref2 = attention_gate_reference(x2, params, in_G, in_L)
    assert jnp.allclose(out2, ref2, atol=1e-5, rtol=1e-5)

    print("KERNEL_OK")
</pallas_src>

<mosaic_0001>
module attributes {stable_mosaic.version = 11 : i64} {
  func.func @_attention_gate_kernel(%arg0: i32, %arg1: i32, %arg2: memref<1x12x256xf32, #tpu.memory_space<vmem>>, %arg3: memref<4x12xf32, #tpu.memory_space<vmem>>, %arg4: memref<4x1xf32, #tpu.memory_space<vmem>>, %arg5: memref<1x4xf32, #tpu.memory_space<vmem>>, %arg6: memref<1x1xf32, #tpu.memory_space<vmem>>, %arg7: memref<1x12x256xf32, #tpu.memory_space<vmem>>) attributes {dimension_semantics = [#tpu.dimension_semantics<parallel>, #tpu.dimension_semantics<parallel>], iteration_bounds = array<i64: 2, 1>, scalar_prefetch = 0 : i64, scratch_operands = 0 : i64, tpu.core_type = #tpu.core_type<tc>, window_params = [{transform_indices = @transform_0, window_bounds = array<i64: 1, 12, 256>}, {pipeline_mode = #tpu.pipeline_mode<synchronous>, transform_indices = @transform_1, window_bounds = array<i64: 4, 12>}, {pipeline_mode = #tpu.pipeline_mode<synchronous>, transform_indices = @transform_2, window_bounds = array<i64: 4, 1>}, {pipeline_mode = #tpu.pipeline_mode<synchronous>, transform_indices = @transform_3, window_bounds = array<i64: 1, 4>}, {pipeline_mode = #tpu.pipeline_mode<synchronous>, transform_indices = @transform_4, window_bounds = array<i64: 1, 1>}, {transform_indices = @transform_5, window_bounds = array<i64: 1, 12, 256>}]} {
    %c0 = arith.constant 0 : index
    %c0_0 = arith.constant 0 : index
    %0 = vector.load %arg3[%c0, %c0_0] : memref<4x12xf32, #tpu.memory_space<vmem>>, vector<4x12xf32>
    %c0_1 = arith.constant 0 : index
    %c0_2 = arith.constant 0 : index
    %1 = vector.load %arg4[%c0_1, %c0_2] : memref<4x1xf32, #tpu.memory_space<vmem>>, vector<4x1xf32>
    %c0_3 = arith.constant 0 : index
    %c0_4 = arith.constant 0 : index
    %2 = vector.load %arg5[%c0_3, %c0_4] : memref<1x4xf32, #tpu.memory_space<vmem>>, vector<1x4xf32>
    %c0_5 = arith.constant 0 : index
    %c0_6 = arith.constant 0 : index
    %3 = vector.load %arg6[%c0_5, %c0_6] : memref<1x1xf32, #tpu.memory_space<vmem>>, vector<1x1xf32>
    %4 = tpu.iota {dimensions = array<i32: 0>} : vector<12x1xi32>
    %c4_i32 = arith.constant 4 : i32
    %5 = vector.broadcast %c4_i32 : i32 to vector<12x1xi32>
    %6 = arith.cmpi slt, %4, %5 : vector<12x1xi32>
    %c0_7 = arith.constant 0 : index
    %c0_8 = arith.constant 0 : index
    %c0_9 = arith.constant 0 : index
    %7 = vector.load %arg2[%c0_7, %c0_8, %c0_9] : memref<1x12x256xf32, #tpu.memory_space<vmem>>, vector<1x12x256xf32>
    %8 = vector.shape_cast %7 : vector<1x12x256xf32> to vector<12x256xf32>
    %cst = arith.constant dense<0.000000e+00> : vector<4x256xf32>
    %9 = tpu.matmul %0, %8, %cst {dimension_numbers = #tpu.dot_dimension_numbers<[1], [0], [0], [1], [0, 0, 1, 1], [], []>} : vector<4x12xf32>, vector<12x256xf32>, vector<4x256xf32> -> vector<4x256xf32>
    %10 = vector.broadcast %1 : vector<4x1xf32> to vector<4x256xf32>
    %11 = arith.addf %9, %10 : vector<4x256xf32>
    %cst_10 = arith.constant 0.000000e+00 : f32
    %12 = vector.broadcast %cst_10 : f32 to vector<4x256xf32>
    %13 = arith.maximumf %11, %12 : vector<4x256xf32>
    %cst_11 = arith.constant dense<0.000000e+00> : vector<1x256xf32>
    %14 = tpu.matmul %2, %13, %cst_11 {dimension_numbers = #tpu.dot_dimension_numbers<[1], [0], [0], [1], [0, 0, 1, 1], [], []>} : vector<1x4xf32>, vector<4x256xf32>, vector<1x256xf32> -> vector<1x256xf32>
    %15 = vector.broadcast %3 : vector<1x1xf32> to vector<1x256xf32>
    %16 = arith.addf %14, %15 : vector<1x256xf32>
    %17 = arith.negf %16 : vector<1x256xf32>
    %18 = math.exp %17 : vector<1x256xf32>
    %cst_12 = arith.constant 1.000000e+00 : f32
    %19 = vector.broadcast %cst_12 : f32 to vector<1x256xf32>
    %20 = arith.addf %19, %18 : vector<1x256xf32>
    %21 = arith.divf %19, %20 : vector<1x256xf32>
    %cst_13 = arith.constant 1.000000e+00 : f32
    %22 = vector.shape_cast %6 : vector<12x1xi1> to vector<12x1xi1>
    %23 = vector.broadcast %22 : vector<12x1xi1> to vector<12x256xi1>
    %24 = vector.broadcast %cst_13 : f32 to vector<12x256xf32>
    %25 = vector.shape_cast %21 : vector<1x256xf32> to vector<1x256xf32>
    %26 = vector.broadcast %25 : vector<1x256xf32> to vector<12x256xf32>
    %27 = arith.select %23, %24, %26 : vector<12x256xi1>, vector<12x256xf32>
    %28 = arith.mulf %8, %27 : vector<12x256xf32>
    %c0_14 = arith.constant 0 : index
    %c0_15 = arith.constant 0 : index
    %c0_16 = arith.constant 0 : index
    %29 = vector.load %arg7[%c0_14, %c0_15, %c0_16] : memref<1x12x256xf32, #tpu.memory_space<vmem>>, vector<1x12x256xf32>
    %30 = vector.shape_cast %29 : vector<1x12x256xf32> to vector<12x256xf32>
    %31 = vector.shape_cast %28 : vector<12x256xf32> to vector<1x12x256xf32>
    tpu.vector_store %arg7[%c0_14, %c0_15, %c0_16], %31 {strides = array<i32>} : memref<1x12x256xf32, #tpu.memory_space<vmem>>, vector<1x12x256xf32>,
    return
  }
  func.func @transform_0(%arg0: i32, %arg1: i32) -> (i32, i32, i32) {
    %c0_i32 = arith.constant 0 : i32
    %c0_i32_0 = arith.constant 0 : i32
    return %arg0, %c0_i32, %arg1 : i32, i32, i32
  }
  func.func @transform_1(%arg0: i32, %arg1: i32) -> (i32, i32) {
    %c0_i32 = arith.constant 0 : i32
    %c0_i32_0 = arith.constant 0 : i32
    %c0_i32_1 = arith.constant 0 : i32
    return %c0_i32, %c0_i32_0 : i32, i32
  }
  func.func @transform_2(%arg0: i32, %arg1: i32) -> (i32, i32) {
    %c0_i32 = arith.constant 0 : i32
    %c0_i32_0 = arith.constant 0 : i32
    %c0_i32_1 = arith.constant 0 : i32
    return %c0_i32, %c0_i32_0 : i32, i32
  }
  func.func @transform_3(%arg0: i32, %arg1: i32) -> (i32, i32) {
    %c0_i32 = arith.constant 0 : i32
    %c0_i32_0 = arith.constant 0 : i32
    %c0_i32_1 = arith.constant 0 : i32
    return %c0_i32, %c0_i32_0 : i32, i32
  }
  func.func @transform_4(%arg0: i32, %arg1: i32) -> (i32, i32) {
    %c0_i32 = arith.constant 0 : i32
    %c0_i32_0 = arith.constant 0 : i32
    %c0_i32_1 = arith.constant 0 : i32
    return %c0_i32, %c0_i32_0 : i32, i32
  }
  func.func @transform_5(%arg0: i32, %arg1: i32) -> (i32, i32, i32) {
    %c0_i32 = arith.constant 0 : i32
    %c0_i32_0 = arith.constant 0 : i32
    return %arg0, %c0_i32, %arg1 : i32, i32, i32
  }
}

</mosaic_0001>

<llo_original>
// kernel: tpu_custom_call.1
$region0: #{tpu_custom_call.1}
  #allocation0 [shape = 'u32[]', space=smem, size = 0x4, offset = 0x4, fixed_abs, tag = 'smem constant byte address 0x4 - core index']
  #allocation1 [shape = 'u32[144,128]{1,0:T(1,128)}', space=vmem, size = 0x12000, scoped, tag = 'internal scratch']
  #allocation2 [shape = 'f32[1,1]{1,0:T(1,128)S(1)}', space=vmem, size = 0x200, scoped, tag = 'scoped memory for tpu_custom_call.1']
  %s0 = inlined_call_operand.vmem [shape: f32[2,12,256], index: 0, kind: input, shape index: {}]
  %s1 = inlined_call_operand.vmem [shape: f32[4,12], index: 1, kind: input, shape index: {}]
  %s2 = inlined_call_operand.vmem [shape: f32[4,1], index: 2, kind: input, shape index: {}]
  %s3 = inlined_call_operand.vmem [shape: f32[1,4], index: 3, kind: input, shape index: {}]
  %s4 = inlined_call_operand.<no memory space> [shape: f32[1,1], index: 4, kind: input, shape index: {}]
  %s5 = inlined_call_operand.vmem [shape: f32[2,12,256], index: 5, kind: output, shape index: {}]
  %s6 = sld [smem:[#allocation0]]
  $region53: #{tpu_custom_call.1} parent=0
    _
  %s8 = ssub.s32 1, %s6
  %s9 = scalar_select 0, %s8, %s6
  %v10 = vstv %s4
  %11 = vst [vmem:[#allocation2] sm:$0x1] %v10
  loop: start=0, step=1, limit=4
  $region2: #{tpu_custom_call.1} parent=0 // loop_pre_header
    _
  $region3: #{tpu_custom_call.1} parent=0 // loop_header
    %s13 = sphi 0, %s17
    %p14 = scmp.ge.s32.totalorder %s13, 4
    %s20 = sphi 0, %s32
    %s21 = sphi 0, %s28
    %s22 = sphi 0, %s20
    %s23 = sphi 0, %s21
    %s24 = sphi 0, %s22
    %s25 = sphi 0, %s23
    %s37 = sphi 0, %s39
    %s40 = sphi 0, %s37
    %s41 = sphi 0, %s40
    %s57 = sphi 0, %s41
    %s61 = sphi 0, %s61
    %s63 = sphi 0, %s61
    %s64 = sphi 0, %s63
    %s78 = sphi 0, %s64
    %s82 = sphi 0, %s82
    %s84 = sphi 0, %s82
    %s85 = sphi 0, %s84
    %s99 = sphi 0, %s85
    %s103 = sphi 0, %s103
    %s105 = sphi 0, %s103
    %s106 = sphi 0, %s105
    %s120 = sphi 0, %s106
    %s124 = sphi 0, %s124
    %s126 = sphi 0, %s124
    %s127 = sphi 0, %s126
    %s141 = sphi 0, %s127
    %s149 = sphi 0, %s151
    %s152 = sphi 0, %s149
    %s153 = sphi 0, %s152
    %s169 = sphi 0, %s153
  $region4: #{tpu_custom_call.1} parent=0 // loop_header_branch
    %16 = sbr.rel (%p14) target = $region8
  $region5: #{tpu_custom_call.1} parent=0 // loop_body
    %s18 = ssub.s32 %s13, 1
    %s19 = ssub.s32 %s13, 2
    %s26 = sadd.s32 1, %s21
    %p27 = scmp.ge.s32.totalorder %s26, 1
    %s28 = scalar_select %p27, 0, %s26
    %s29 = sadd.s32 1, %s20
    %s30 = scalar_select %p27, %s29, %s20
    %p31 = scmp.ge.s32.totalorder %s30, 2
    %s32 = scalar_select %p31, 0, %s30
    %s33 = ssub.s32 %s20, %s32
    %s34 = ssub.s32 %s21, %s28
    %s35 = sor.u32 %s33, %s34
    %p36 = scmp.eq.s32.totalorder %s35, 0
    %s38 = sadd.s32 %s37, 1
    %s39 = scalar_select %p36, %s37, %s38
    %p42 = pneg %p36
    %p43 = scmp.eq.s32.totalorder %s13, 1
    %p44 = por %p42, %p43
    %p45 = scmp.ne.s32.totalorder %s37, %s40
    %p46 = scmp.eq.s32.totalorder %s13, 0
    %p47 = por %p45, %p46
    %p48 = scmp.ne.s32.totalorder %s37, %s40
    %p49 = scmp.eq.s32.totalorder %s18, 1
    %p50 = por %p48, %p49
    %p51 = scmp.ne.s32.totalorder %s40, %s41
    %p52 = scmp.eq.s32.totalorder %s18, 0
    %p53 = por %p51, %p52
    %p54 = scmp.ne.s32.totalorder %s40, %s41
    %p55 = scmp.eq.s32.totalorder %s19, 1
    %p56 = por %p54, %p55
    %p58 = scmp.ne.s32.totalorder %s41, %s57
    %p59 = scmp.eq.s32.totalorder %s19, 0
    %p60 = por %p58, %p59
    %s62 = sadd.s32 %s61, 1
    %p65 = scmp.eq.s32.totalorder %s13, 1
    %p66 = scmp.ne.s32.totalorder %s61, %s63
    %p67 = scmp.eq.s32.totalorder %s13, 0
    %p68 = por %p66, %p67
    %p69 = scmp.ne.s32.totalorder %s61, %s63
    %p70 = scmp.eq.s32.totalorder %s18, 1
    %p71 = por %p69, %p70
    %p72 = scmp.ne.s32.totalorder %s63, %s64
    %p73 = scmp.eq.s32.totalorder %s18, 0
    %p74 = por %p72, %p73
    %p75 = scmp.ne.s32.totalorder %s63, %s64
    %p76 = scmp.eq.s32.totalorder %s19, 1
    %p77 = por %p75, %p76
    %p79 = scmp.ne.s32.totalorder %s64, %s78
    %p80 = scmp.eq.s32.totalorder %s19, 0
    %p81 = por %p79, %p80
    %s83 = sadd.s32 %s82, 1
    %p86 = scmp.eq.s32.totalorder %s13, 1
    %p87 = scmp.ne.s32.totalorder %s82, %s84
    %p88 = scmp.eq.s32.totalorder %s13, 0
    %p89 = por %p87, %p88
    %p90 = scmp.ne.s32.totalorder %s82, %s84
    %p91 = scmp.eq.s32.totalorder %s18, 1
    %p92 = por %p90, %p91
    %p93 = scmp.ne.s32.totalorder %s84, %s85
    %p94 = scmp.eq.s32.totalorder %s18, 0
    %p95 = por %p93, %p94
    %p96 = scmp.ne.s32.totalorder %s84, %s85
    %p97 = scmp.eq.s32.totalorder %s19, 1
    %p98 = por %p96, %p97
    %p100 = scmp.ne.s32.totalorder %s85, %s99
    %p101 = scmp.eq.s32.totalorder %s19, 0
    %p102 = por %p100, %p101
    %s104 = sadd.s32 %s103, 1
    %p107 = scmp.eq.s32.totalorder %s13, 1
    %p108 = scmp.ne.s32.totalorder %s103, %s105
    %p109 = scmp.eq.s32.totalorder %s13, 0
    %p110 = por %p108, %p109
    %p111 = scmp.ne.s32.totalorder %s103, %s105
    %p112 = scmp.eq.s32.totalorder %s18, 1
    %p113 = por %p111, %p112
    %p114 = scmp.ne.s32.totalorder %s105, %s106
    %p115 = scmp.eq.s32.totalorder %s18, 0
    %p116 = por %p114, %p115
    %p117 = scmp.ne.s32.totalorder %s105, %s106
    %p118 = scmp.eq.s32.totalorder %s19, 1
    %p119 = por %p117, %p118
    %p121 = scmp.ne.s32.totalorder %s106, %s120
    %p122 = scmp.eq.s32.totalorder %s19, 0
    %p123 = por %p121, %p122
    %s125 = sadd.s32 %s124, 1
    %p128 = scmp.eq.s32.totalorder %s13, 1
    %p129 = scmp.ne.s32.totalorder %s124, %s126
    %p130 = scmp.eq.s32.totalorder %s13, 0
    %p131 = por %p129, %p130
    %p132 = scmp.ne.s32.totalorder %s124, %s126
    %p133 = scmp.eq.s32.totalorder %s18, 1
    %p134 = por %p132, %p133
    %p135 = scmp.ne.s32.totalorder %s126, %s127
    %p136 = scmp.eq.s32.totalorder %s18, 0
    %p137 = por %p135, %p136
    %p138 = scmp.ne.s32.totalorder %s126, %s127
    %p139 = scmp.eq.s32.totalorder %s19, 1
    %p140 = por %p138, %p139
    %p142 = scmp.ne.s32.totalorder %s127, %s141
    %p143 = scmp.eq.s32.totalorder %s19, 0
    %p144 = por %p142, %p143
    %s145 = ssub.s32 %s20, %s32
    %s146 = ssub.s32 %s21, %s28
    %s147 = sor.u32 %s145, %s146
    %p148 = scmp.eq.s32.totalorder %s147, 0
    %s150 = sadd.s32 %s149, 1
    %s151 = scalar_select %p148, %s149, %s150
    %p154 = pneg %p148
    %p155 = scmp.eq.s32.totalorder %s13, 1
    %p156 = por %p154, %p155
    %p157 = scmp.ne.s32.totalorder %s149, %s152
    %p158 = scmp.eq.s32.totalorder %s13, 0
    %p159 = por %p157, %p158
    %p160 = scmp.ne.s32.totalorder %s149, %s152
    %p161 = scmp.eq.s32.totalorder %s18, 1
    %p162 = por %p160, %p161
    %p163 = scmp.ne.s32.totalorder %s152, %s153
    %p164 = scmp.eq.s32.totalorder %s18, 0
    %p165 = por %p163, %p164
    %p166 = scmp.ne.s32.totalorder %s152, %s153
    %p167 = scmp.eq.s32.totalorder %s19, 1
    %p168 = por %p166, %p167
    %p170 = scmp.ne.s32.totalorder %s153, %s169
    %p171 = scmp.eq.s32.totalorder %s19, 0
    %p172 = por %p170, %p171
    %p173 = scmp.le.s32.totalorder 1, %s13
    %p174 = scmp.lt.s32.totalorder %s13, 3
    %p175 = pnand %p173, %p174
    %p176 = pneg %p175
    // Predicated region
    $region9: #{tpu_custom_call.1} parent=5 // pred_check
      _
    $region10: #{tpu_custom_call.1} parent=5 // pred_check_branch
      %178 = sbr.rel (%p175) target = $region12
    $region11: #{tpu_custom_call.1} parent=5 // pred_region
      %s179 = ssub.s32 %s13, 1
      // Predicated region
      $region13: #{tpu_custom_call.1} parent=11 // pred_check
        %p180 = pneg %p74
      $region14: #{tpu_custom_call.1} parent=11 // pred_check_branch
        %182 = sbr.rel (%p180) target = $region16
      $region15: #{tpu_custom_call.1} parent=11 // pred_region
        _
      $region16: #{tpu_custom_call.1} parent=11 // pred_fallthru
        _
      // Predicated region
      $region17: #{tpu_custom_call.1} parent=11 // pred_check
        %p183 = pneg %p95
      $region18: #{tpu_custom_call.1} parent=11 // pred_check_branch
        %185 = sbr.rel (%p183) target = $region20
      $region19: #{tpu_custom_call.1} parent=11 // pred_region
        _
      $region20: #{tpu_custom_call.1} parent=11 // pred_fallthru
        _
      // Predicated region
      $region21: #{tpu_custom_call.1} parent=11 // pred_check
        %p186 = pneg %p116
      $region22: #{tpu_custom_call.1} parent=11 // pred_check_branch
        %188 = sbr.rel (%p186) target = $region24
      $region23: #{tpu_custom_call.1} parent=11 // pred_region
        _
      $region24: #{tpu_custom_call.1} parent=11 // pred_fallthru
        _
      // Predicated region
      $region25: #{tpu_custom_call.1} parent=11 // pred_check
        %p189 = pneg %p137
      $region26: #{tpu_custom_call.1} parent=11 // pred_check_branch
        %191 = sbr.rel (%p189) target = $region28
      $region27: #{tpu_custom_call.1} parent=11 // pred_region
        _
      $region28: #{tpu_custom_call.1} parent=11 // pred_fallthru
        _
    $region12: #{tpu_custom_call.1} parent=5 // pred_fallthru
      _
    %p192 = scmp.lt.s32.totalorder %s13, 2
    // Predicated region
    $region29: #{tpu_custom_call.1} parent=5 // pred_check
      %p193 = pneg %p192
    $region30: #{tpu_custom_call.1} parent=5 // pred_check_branch
      %195 = sbr.rel (%p193) target = $region32
    $region31: #{tpu_custom_call.1} parent=5 // pred_region
      // Predicated region
      $region33: #{tpu_custom_call.1} parent=31 // pred_check
        %p196 = pneg %p47
      $region34: #{tpu_custom_call.1} parent=31 // pred_check_branch
        %198 = sbr.rel (%p196) target = $region36
      $region35: #{tpu_custom_call.1} parent=31 // pred_region
        %s199 = smul.u32 2, %s21
        %p200 = scmp.lt.s32.totalorder %s20, 1
        %s201 = scalar_select %p200, %s20, 1
        %p202 = scmp.lt.s32.totalorder %s199, 1
        %s203 = scalar_select %p202, %s199, 1
        %s204 = smul.addr %s201, 4
        %s205 = sadd.s32 %s203, %s204
        %s206 = smul.addr %s205, 8
        %s207 = scalar_lea.vmem %s0, %s206
        %s208 = smul.u32 2, %s21
      $region36: #{tpu_custom_call.1} parent=31 // pred_fallthru
        _
    $region32: #{tpu_custom_call.1} parent=5 // pred_fallthru
      _
    %p209 = scmp.le.s32.totalorder 1, %s13
    %p210 = scmp.lt.s32.totalorder %s13, 3
    %p211 = pnand %p209, %p210
    %p212 = pneg %p211
    // Predicated region
    $region37: #{tpu_custom_call.1} parent=5 // pred_check
      _
    $region38: #{tpu_custom_call.1} parent=5 // pred_check_branch
      %214 = sbr.rel (%p211) target = $region40
    $region39: #{tpu_custom_call.1} parent=5 // pred_region
      %s215 = ssub.s32 %s13, 1
      %s216 = smul.u32 2, %s23
      %p217 = scmp.lt.s32.totalorder %s22, 1
      %s218 = scalar_select %p217, %s22, 1
      %p219 = scmp.lt.s32.totalorder %s216, 1
      %s220 = scalar_select %p219, %s216, 1
      %s221 = smul.addr %s218, 4
      %s222 = sadd.s32 %s220, %s221
      %s223 = smul.addr %s222, 8
      %s224 = scalar_lea.vmem %s0, %s223
      %p225 = pneg %p53
      %p226 = pneg %p50
      %p227 = pneg %p74
      %p228 = pneg %p71
      %p229 = pneg %p95
      %p230 = pneg %p92
      %p231 = pneg %p116
      %p232 = pneg %p113
      %p233 = pneg %p137
      %p234 = pneg %p134
      %p235 = pneg %p165
      %p236 = pneg %p162
      %s237 = smul.u32 2, %s23
      %p238 = scmp.lt.s32.totalorder %s22, 1
      %s239 = scalar_select %p238, %s22, 1
      %p240 = scmp.lt.s32.totalorder %s237, 1
      %s241 = scalar_select %p240, %s237, 1
      %s242 = smul.addr %s239, 4
      %s243 = sadd.s32 %s241, %s242
      %s244 = smul.addr %s243, 8
      %s245 = scalar_lea.vmem %s5, %s244
      %s246 = smul.u32 2, %s23
      %p247 = scmp.lt.s32.totalorder %s22, 1
      %s248 = scalar_select %p247, %s22, 1
      %p249 = scmp.lt.s32.totalorder %s246, 1
      %s250 = scalar_select %p249, %s246, 1
      %s251 = smul.addr %s248, 4
      %s252 = sadd.s32 %s250, %s251
      %s253 = smul.addr %s252, 8
      %s254 = scalar_lea.vmem %s0, %s253
      %s255 = smul.u32 2, %s23
      %s256 = smul.u32 2, %s23
      %p257 = scmp.lt.s32.totalorder %s22, 1
      %s258 = scalar_select %p257, %s22, 1
      %p259 = scmp.lt.s32.totalorder %s256, 1
      %s260 = scalar_select %p259, %s256, 1
      %s261 = smul.addr %s258, 4
      %s262 = sadd.s32 %s260, %s261
      %s263 = smul.addr %s262, 8
      %s264 = scalar_lea.vmem %s5, %s263
      %s265 = smul.u32 2, %s23
      %v266 = vld [vmem:[%s1] sm:$0xf]
      %v267 = vld [vmem:[%s2] sm:$0xf]
      %v268 = vld [vmem:[%s3] sm:$0x1]
      %v269 = vld [vmem:[#allocation2] sm:$0x1]
      %v270 = vlaneseq
      %v271 = vshrl.u32 %v270, 7
      %v272 = vadd.s32 %v271, 8
      %vm273 = vcmp.lt.s32.totalorder %v271, 4
      %vm274 = vcmp.lt.s32.totalorder %v272, 4
      %v275 = vld [vmem:[%s254] sm:$0xff]
      %v276 = vld [vmem:[%s254 + $0x8] sm:$0xff]
      %v277 = vld [vmem:[%s254 + $0x10] sm:$0xf]
      %v278 = vld [vmem:[%s254 + $0x18] sm:$0xf]
      %280 = vset.pattern.permute.xlu0 0
      %281 = vperm.xlu0 %280, %v267
      %v282 = vpop.permute.xlu0 %281
      %vm284 = vcmask 97280
      %v286 = vsel %vm284, %v266, 0
      %vm288 = vcmask 1043456
      %v290 = vsel %vm288, %v277, 0
      %v293 = vsel %vm288, %v278, 0
      %295 = vmatprep.subr.mxu0 %v276
      %296 = vmatpush1.msra.mxu0 %v275
      %297 = vmatprep.subr.mxu0 %v293
      %298 = vmatpush1.msra.mxu0 %v290
      %299 = vmatprep.subr.mxu0 0.0
      %300 = vmatpush1.msra.mxu0 0.0
      %301 = vmatprep.subr.mxu0 0.0
      %302 = vmatpush1.msra.mxu0 0.0
      %303 = vmatprep.subr.mxu0 0.0
      %304 = vmatpush1.msra.mxu0 0.0
      %305 = vmatprep.subr.mxu0 0.0
      %306 = vmatpush1.msra.mxu0 0.0
      %307 = vmatprep.subr.mxu0 0.0
      %308 = vmatpush1.msra.mxu0 0.0
      %309 = vmatprep.subr.mxu0 0.0
      %310 = vmatpush1.msra.mxu0 0.0
      %311 = vmatprep.subr.mxu0 0.0
      %312 = vmatpush1.msra.mxu0 0.0
      %313 = vmatprep.subr.mxu0 0.0
      %314 = vmatpush1.msra.mxu0 0.0
      %315 = vmatprep.subr.mxu0 0.0
      %316 = vmatpush1.msra.mxu0 0.0
      %317 = vmatprep.subr.mxu0 0.0
      %318 = vmatpush1.msra.mxu0 0.0
      %319 = vmatprep.subr.mxu0 0.0
      %320 = vmatpush1.msra.mxu0 0.0
      %321 = vmatprep.subr.mxu0 0.0
      %322 = vmatpush1.msra.mxu0 0.0
      %323 = vmatprep.subr.mxu0 0.0
      %324 = vmatpush1.msra.mxu0 0.0
      %325 = vmatprep.subr.mxu0 0.0
      %326 = vmatpush1.msra.mxu0 0.0
      %327 = vmatprep.subr.mxu0 0.0
      %328 = vmatpush1.msra.mxu0 0.0
      %329 = vmatprep.subr.mxu0 0.0
      %330 = vmatpush1.msra.mxu0 0.0
      %331 = vmatprep.subr.mxu0 0.0
      %332 = vmatpush1.msra.mxu0 0.0
      %333 = vmatprep.subr.mxu0 0.0
      %334 = vmatpush1.msra.mxu0 0.0
      %335 = vmatprep.subr.mxu0 0.0
      %336 = vmatpush1.msra.mxu0 0.0
      %337 = vmatprep.subr.mxu0 0.0
      %338 = vmatpush1.msra.mxu0 0.0
      %339 = vmatprep.subr.mxu0 0.0
      %340 = vmatpush1.msra.mxu0 0.0
      %341 = vmatprep.subr.mxu0 0.0
      %342 = vmatpush1.msra.mxu0 0.0
      %343 = vmatprep.subr.mxu0 0.0
      %344 = vmatpush1.msra.mxu0 0.0
      %345 = vmatprep.subr.mxu0 0.0
      %346 = vmatpush1.msra.mxu0 0.0
      %347 = vmatprep.subr.mxu0 0.0
      %348 = vmatpush1.msra.mxu0 0.0
      %349 = vmatprep.subr.mxu0 0.0
      %350 = vmatpush1.msra.mxu0 0.0
      %351 = vmatprep.subr.mxu0 0.0
      %352 = vmatpush1.msra.mxu0 0.0
      %353 = vmatprep.subr.mxu0 0.0
      %354 = vmatpush1.msra.mxu0 0.0
      %355 = vmatprep.subr.mxu0 0.0
      %356 = vmatpush1.msra.mxu0 0.0
      %357 = vmatprep.subr.mxu0 0.0
      %358 = vmatpush1.msra.mxu0 0.0
      %359 = vmatprep.mubr.f32.mxu0 0.0
      %360 = vmatmul.mubr.f32.gmra.mrb[0].mxu0 %v286
      %v361 = vpop.f32.mrb[0].mxu0
      %v362 = vadd.f32 %v282, %v361
      %v363 = vpop.f32.mrb[0].mxu0
      %v364 = vadd.f32 %v282, %v363
      %365 = vdwg.mxu0
      %v366 = vmax.f32 %v362, 0.0
      %v367 = vmax.f32 %v364, 0.0
      %369 = vset.pattern.permute.xlu0 0
      %370 = vperm.xlu0 %369, %v269
      %v371 = vpop.permute.xlu0 %370
      %v373 = vlaneseq
      %v374 = vshrl.u32 %v373, 7
      %v375 = vsub.s32 0, %v374
      %v376 = vrot.slane %v371, %v375
      %vm377 = vcmask 31744
      %v379 = vsel %vm377, %v268, 0
      %v382 = vsel %vm288, %v366, 0
      %v385 = vsel %vm288, %v367, 0
      %387 = vmatprep.subr.mxu0 %v385
      %388 = vmatpush1.msra.mxu0 %v382
      %389 = vmatprep.subr.mxu0 0.0
      %390 = vmatpush1.msra.mxu0 0.0
      %391 = vmatprep.subr.mxu0 0.0
      %392 = vmatpush1.msra.mxu0 0.0
      %393 = vmatprep.subr.mxu0 0.0
      %394 = vmatpush1.msra.mxu0 0.0
      %395 = vmatprep.subr.mxu0 0.0
      %396 = vmatpush1.msra.mxu0 0.0
      %397 = vmatprep.subr.mxu0 0.0
      %398 = vmatpush1.msra.mxu0 0.0
      %399 = vmatprep.subr.mxu0 0.0
      %400 = vmatpush1.msra.mxu0 0.0
      %401 = vmatprep.subr.mxu0 0.0
      %402 = vmatpush1.msra.mxu0 0.0
      %403 = vmatprep.subr.mxu0 0.0
      %404 = vmatpush1.msra.mxu0 0.0
      %405 = vmatprep.subr.mxu0 0.0
      %406 = vmatpush1.msra.mxu0 0.0
      %407 = vmatprep.subr.mxu0 0.0
      %408 = vmatpush1.msra.mxu0 0.0
      %409 = vmatprep.subr.mxu0 0.0
      %410 = vmatpush1.msra.mxu0 0.0
      %411 = vmatprep.subr.mxu0 0.0
      %412 = vmatpush1.msra.mxu0 0.0
      %413 = vmatprep.subr.mxu0 0.0
      %414 = vmatpush1.msra.mxu0 0.0
      %415 = vmatprep.subr.mxu0 0.0
      %416 = vmatpush1.msra.mxu0 0.0
      %417 = vmatprep.subr.mxu0 0.0
      %418 = vmatpush1.msra.mxu0 0.0
      %419 = vmatprep.subr.mxu0 0.0
      %420 = vmatpush1.msra.mxu0 0.0
      %421 = vmatprep.subr.mxu0 0.0
      %422 = vmatpush1.msra.mxu0 0.0
      %423 = vmatprep.subr.mxu0 0.0
      %424 = vmatpush1.msra.mxu0 0.0
      %425 = vmatprep.subr.mxu0 0.0
      %426 = vmatpush1.msra.mxu0 0.0
      %427 = vmatprep.subr.mxu0 0.0
      %428 = vmatpush1.msra.mxu0 0.0
      %429 = vmatprep.subr.mxu0 0.0
      %430 = vmatpush1.msra.mxu0 0.0
      %431 = vmatprep.subr.mxu0 0.0
      %432 = vmatpush1.msra.mxu0 0.0
      %433 = vmatprep.subr.mxu0 0.0
      %434 = vmatpush1.msra.mxu0 0.0
      %435 = vmatprep.subr.mxu0 0.0
      %436 = vmatpush1.msra.mxu0 0.0
      %437 = vmatprep.subr.mxu0 0.0
      %438 = vmatpush1.msra.mxu0 0.0
      %439 = vmatprep.subr.mxu0 0.0
      %440 = vmatpush1.msra.mxu0 0.0
      %441 = vmatprep.subr.mxu0 0.0
      %442 = vmatpush1.msra.mxu0 0.0
      %443 = vmatprep.subr.mxu0 0.0
      %444 = vmatpush1.msra.mxu0 0.0
      %445 = vmatprep.subr.mxu0 0.0
      %446 = vmatpush1.msra.mxu0 0.0
      %447 = vmatprep.subr.mxu0 0.0
      %448 = vmatpush1.msra.mxu0 0.0
      %449 = vmatprep.subr.mxu0 0.0
      %450 = vmatpush1.msra.mxu0 0.0
      %451 = vmatprep.mubr.f32.mxu0 0.0
      %452 = vmatmul.mubr.f32.gmra.mrb[0].mxu0 %v379
      %v453 = vpop.f32.mrb[0].mxu0
      %v454 = vadd.f32 %v376, %v453
      %v455 = vpop.f32.mrb[0].mxu0
      %v456 = vadd.f32 %v376, %v455
      %457 = vdwg.mxu0
      %v458 = vxor.u32 %v454, 2147483648
      %v459 = vxor.u32 %v456, 2147483648
      %v460 = vmul.f32 %v458, 1.442695
      %v461 = vpow.pop %v460
      %v462 = vmul.f32 %v459, 1.442695
      %v463 = vpow.pop %v462
      %v464 = vadd.f32 %v461, 1.0
      %v465 = vadd.f32 %v463, 1.0
      %v466 = vrcp.pop %v464
      %v467 = vmul.f32 1.0, %v466
      %v468 = vrcp.pop %v465
      %v469 = vmul.f32 1.0, %v468
      %v470 = vsel %vm273, 1, 0
      %v471 = vsel %vm274, 1, 0
      %vm472 = vcmp.eq.s32.totalorder %v470, 1
      %vm473 = vcmp.eq.s32.totalorder %v471, 1
      %v474 = vlaneseq
      %v475 = vshrl.u32 %v474, 7
      %v476 = vsub.s32 0, %v475
      %v477 = vrot.slane %v467, %v476
      %v478 = vlaneseq
      %v479 = vshrl.u32 %v478, 7
      %v480 = vsub.s32 0, %v479
      %v481 = vrot.slane %v469, %v480
      %v482 = vsel %vm472, 1.0, %v477
      %v483 = vsel %vm472, 1.0, %v481
      %v484 = vsel %vm473, 1.0, %v477
      %v485 = vsel %vm473, 1.0, %v481
      %v486 = vmul.f32 %v275, %v482
      %v487 = vmul.f32 %v276, %v483
      %v488 = vmul.f32 %v277, %v484
      %v489 = vmul.f32 %v278, %v485
      %490 = vst [vmem:[%s264] sm:$0xff] %v486
      %491 = vst [vmem:[%s264 + $0x8] sm:$0xff] %v487
      %492 = vst [vmem:[%s264 + $0x10] sm:$0xf] %v488
      %493 = vst [vmem:[%s264 + $0x18] sm:$0xf] %v489
      %s494 = smul.u32 2, %s23
      %p495 = scmp.lt.s32.totalorder %s22, 1
      %s496 = scalar_select %p495, %s22, 1
      %p497 = scmp.lt.s32.totalorder %s494, 1
      %s498 = scalar_select %p497, %s494, 1
      %s499 = smul.addr %s496, 4
      %s500 = sadd.s32 %s498, %s499
      %s501 = smul.addr %s500, 8
      %s502 = scalar_lea.vmem %s5, %s501
      // Predicated region
      $region41: #{tpu_custom_call.1} parent=39 // pred_check
        %p503 = pneg %p162
      $region42: #{tpu_custom_call.1} parent=39 // pred_check_branch
        %505 = sbr.rel (%p503) target = $region44
      $region43: #{tpu_custom_call.1} parent=39 // pred_region
        %s506 = smul.u32 2, %s23
      $region44: #{tpu_custom_call.1} parent=39 // pred_fallthru
        _
    $region40: #{tpu_custom_call.1} parent=5 // pred_fallthru
      _
    %p507 = scmp.le.s32.totalorder 2, %s13
    // Predicated region
    $region45: #{tpu_custom_call.1} parent=5 // pred_check
      %p508 = pneg %p507
    $region46: #{tpu_custom_call.1} parent=5 // pred_check_branch
      %510 = sbr.rel (%p508) target = $region48
    $region47: #{tpu_custom_call.1} parent=5 // pred_region
      %s511 = ssub.s32 %s13, 2
      // Predicated region
      $region49: #{tpu_custom_call.1} parent=47 // pred_check
        %p512 = pneg %p168
      $region50: #{tpu_custom_call.1} parent=47 // pred_check_branch
        %514 = sbr.rel (%p512) target = $region52
      $region51: #{tpu_custom_call.1} parent=47 // pred_region
        %s515 = smul.u32 2, %s25
        %p516 = scmp.lt.s32.totalorder %s24, 1
        %s517 = scalar_select %p516, %s24, 1
        %p518 = scmp.lt.s32.totalorder %s515, 1
        %s519 = scalar_select %p518, %s515, 1
        %s520 = smul.addr %s517, 4
        %s521 = sadd.s32 %s519, %s520
        %s522 = smul.addr %s521, 8
        %s523 = scalar_lea.vmem %s5, %s522
      $region52: #{tpu_custom_call.1} parent=47 // pred_fallthru
        _
    $region48: #{tpu_custom_call.1} parent=5 // pred_fallthru
      _
  $region6: #{tpu_custom_call.1} parent=0 // loop_footer
    %s17 = sadd.s32 1, %s13
  $region7: #{tpu_custom_call.1} parent=0 // loop_footer_branch
    %12 = sbr.rel target = $region3
  $region8: #{tpu_custom_call.1} parent=0 // loop_exit
    _

</llo_original>
